<compile_context>
chip_gen: v6e
topology: v6e:2x2x1
jax: 0.10.0
libtpu: 0.0.40
codegen_flags: <defaults>
</compile_context>

<pallas_src>
import math

import jax
import jax.numpy as jnp
from jax.experimental import pallas as pl
from jax.experimental.pallas import tpu as pltpu


def _make_cnn_kernel(W):
    """Kernel factory; W (the conv axis length) is static and closed over."""

    def kernel(x_ref, w1_ref, b1_ref, w2_ref, b2_ref, o_ref):
        # x_ref : (1, Cin, P)  f32   P = TRh*W flat positions p = r*W + w (lane axis)
        # w1_ref: (3, C1, Cin) f32   BN1 scale folded; index 0/1/2 = tap x[w-1]/x[w]/x[w+1]
        # b1_ref: (C1, 1)      f32   folded conv-bias + BN bias
        # w2_ref: (3, C1, C1)  bf16  BN2 scale folded
        # b2_ref: (C1, 1)      f32
        # o_ref : (1, C1, P)         lane-dense output block
        P = x_ref.shape[-1]

        # w-position within each row; used to zero the conv "padding" taps at row edges.
        wpos = jax.lax.broadcasted_iota(jnp.int32, (1, P), 1) % W
        not_left = wpos != 0            # the x[w-1] tap reads padding where w == 0
        not_right = wpos != (W - 1)     # the x[w+1] tap reads padding where w == W-1

        def conv3_bn_relu(y, w_ref, b_ref):
            # out[:, p] = Wl @ y[:, p-1] + Wc @ y[:, p] + Wr @ y[:, p+1]  (+bias, ReLU)
            # Lanes are independent under the channel contraction, so rolling the
            # matmul RESULT along lanes is equivalent to rolling the input — this
            # avoids materializing any (3C, P) im2col buffer.
            zl = jnp.dot(w_ref[0], y, preferred_element_type=jnp.float32)
            zc = jnp.dot(w_ref[1], y, preferred_element_type=jnp.float32)
            zr = jnp.dot(w_ref[2], y, preferred_element_type=jnp.float32)
            zl = jnp.where(not_left, pltpu.roll(zl, shift=1, axis=1), 0.0)
            zr = jnp.where(not_right, pltpu.roll(zr, shift=P - 1, axis=1), 0.0)
            return jnp.maximum(zc + zl + zr + b_ref[...], 0.0)

        y1 = conv3_bn_relu(x_ref[0], w1_ref, b1_ref)                   # f32 matmuls (K=Cin)
        y2 = conv3_bn_relu(y1.astype(jnp.bfloat16), w2_ref, b2_ref)    # bf16 matmuls, f32 acc
        o_ref[0] = y2.astype(o_ref.dtype)

    return kernel


def _fold_conv_bn(w, conv_bias, gamma, beta, mean, var, eps=1e-5):
    """Fold inference-mode BN into the conv. Returns (3, Cout, Cin) weights, (Cout,) bias."""
    scale = gamma / jnp.sqrt(var + eps)                                     # (Cout,)
    # PyTorch weight (Cout, Cin, 1, 3) -> (3, Cout, Cin); tap k multiplies x[w + k - 1].
    w_koc = jnp.transpose(w[:, :, 0, :], (2, 0, 1)) * scale[None, :, None]
    bias = (conv_bias - mean) * scale + beta                                # (Cout,)
    return w_koc, bias


def _pick_row_tile(H, W, batch, target_lanes=8192):
    """Largest whole-row tile giving 128-aligned lane blocks, ~target_lanes positions."""
    if (H * W) % 128 != 0:
        return H                          # single whole-image tile (full last dim is legal)
    quant = 128 // math.gcd(128, W)       # smallest row count with rows*W % 128 == 0
    cands = [d for d in range(quant, H + 1, quant) if H % d == 0]
    max_rows = max(quant, target_lanes // max(W, 1))
    if batch < 2:                         # keep >=2 grid steps so both v7x TCs get work
        max_rows = min(max_rows, max(quant, H // 2))
    fit = [d for d in cands if d <= max_rows]
    return max(fit) if fit else min(cands)


def cnn_forward(x_nchw,
                w1, cb1, g1, be1, rm1, rv1,
                w2, cb2, g2, be2, rm2, rv2,
                *, tile_lanes=8192, out_dtype=jnp.float32, eps=1e-5):
    B, Cin, H, W = x_nchw.shape
    C1 = w1.shape[0]

    # --- fold BN (inference) into weights/bias ---
    w1f, b1 = _fold_conv_bn(w1, cb1, g1, be1, rm1, rv1, eps)   # (3, C1, Cin), (C1,)
    w2f, b2 = _fold_conv_bn(w2, cb2, g2, be2, rm2, rv2, eps)   # (3, C1, C1),  (C1,)

    w1c = w1f.astype(jnp.float32)        # layer 1 stays f32 (tiny K, raw-input range)
    w2c = w2f.astype(jnp.bfloat16)       # layer 2 bf16 operands, f32 accumulate
    b1c = b1.reshape(C1, 1).astype(jnp.float32)
    b2c = b2.reshape(C1, 1).astype(jnp.float32)

    # Free relayout: (B, Cin, H, W) -> (B, Cin, H*W). No transposes anywhere.
    x_flat = x_nchw.reshape(B, Cin, H * W).astype(jnp.float32)

    # Whole-row tiles: tiles never start mid-row, so the roll-wrap masking is exact.
    TRh = _pick_row_tile(H, W, B, tile_lanes)
    assert H % TRh == 0
    n_tiles = H // TRh
    P = TRh * W

    out = pl.pallas_call(
        _make_cnn_kernel(W),
        out_shape=jax.ShapeDtypeStruct((B, C1, H * W), out_dtype),
        grid_spec=pltpu.PrefetchScalarGridSpec(
            num_scalar_prefetch=0,
            grid=(B, n_tiles),
            in_specs=[
                pl.BlockSpec((1, Cin, P), lambda b, r: (b, 0, r)),
                pl.BlockSpec((3, C1, Cin), lambda b, r: (0, 0, 0)),
                pl.BlockSpec((C1, 1), lambda b, r: (0, 0)),
                pl.BlockSpec((3, C1, C1), lambda b, r: (0, 0, 0)),
                pl.BlockSpec((C1, 1), lambda b, r: (0, 0)),
            ],
            out_specs=pl.BlockSpec((1, C1, P), lambda b, r: (b, 0, r)),
        ),
        compiler_params=pltpu.CompilerParams(
            dimension_semantics=("parallel", "parallel"),
            vmem_limit_bytes=32 * 1024 * 1024),
    )(x_flat, w1c, b1c, w2c, b2c)

    return out.reshape(B, C1, H, W)      # free: channels already in NCHW order


def _ref_forward(x, w1, cb1, g1, be1, rm1, rv1, w2, cb2, g2, be2, rm2, rv2, eps=1e-5):
    """Pure-JAX f32 reference (independent path via lax.conv_general_dilated)."""

    def conv_bn_relu(x_nhwc, w, cb, g, be, rm, rv):
        w_hwio = jnp.transpose(w, (2, 3, 1, 0))   # (1, 3, Cin, Cout)
        y = jax.lax.conv_general_dilated(
            x_nhwc, w_hwio, window_strides=(1, 1),
            padding=((0, 0), (1, 1)),
            dimension_numbers=("NHWC", "HWIO", "NHWC"),
            precision=jax.lax.Precision.HIGHEST,
        ) + cb
        y = (y - rm) / jnp.sqrt(rv + eps) * g + be
        return jnp.maximum(y, 0.0)

    x_nhwc = jnp.transpose(x, (0, 2, 3, 1))
    y = conv_bn_relu(x_nhwc, w1, cb1, g1, be1, rm1, rv1)
    y = conv_bn_relu(y, w2, cb2, g2, be2, rm2, rv2)
    return jnp.transpose(y, (0, 3, 1, 2))


if __name__ == "__main__":
    key = jax.random.PRNGKey(0)
    ks = jax.random.split(key, 13)

    B, Cin, H, W = 2, 2, 16, 16       # module fixes Cin=2 (Conv2d(2, 32, (1,3)))
    C1 = 32

    x = jax.random.normal(ks[0], (B, Cin, H, W), jnp.float32)

    # conv1 / bn1 parameters (PyTorch shapes)
    w1 = 0.1 * jax.random.normal(ks[1], (C1, Cin, 1, 3), jnp.float32)
    cb1 = 0.1 * jax.random.normal(ks[2], (C1,), jnp.float32)
    g1 = 1.0 + 0.1 * jax.random.normal(ks[3], (C1,), jnp.float32)
    be1 = 0.1 * jax.random.normal(ks[4], (C1,), jnp.float32)
    rm1 = 0.1 * jax.random.normal(ks[5], (C1,), jnp.float32)
    rv1 = jax.random.uniform(ks[6], (C1,), jnp.float32, 0.5, 1.5)

    # conv2 / bn2 parameters
    w2 = 0.1 * jax.random.normal(ks[7], (C1, C1, 1, 3), jnp.float32)
    cb2 = 0.1 * jax.random.normal(ks[8], (C1,), jnp.float32)
    g2 = 1.0 + 0.1 * jax.random.normal(ks[9], (C1,), jnp.float32)
    be2 = 0.1 * jax.random.normal(ks[10], (C1,), jnp.float32)
    rm2 = 0.1 * jax.random.normal(ks[11], (C1,), jnp.float32)
    rv2 = jax.random.uniform(ks[12], (C1,), jnp.float32, 0.5, 1.5)

    fwd = jax.jit(cnn_forward)
    out = fwd(x, w1, cb1, g1, be1, rm1, rv1, w2, cb2, g2, be2, rm2, rv2)
    out = jax.block_until_ready(out)

    assert out.shape == (B, C1, H, W), out.shape
    ref = _ref_forward(x, w1, cb1, g1, be1, rm1, rv1, w2, cb2, g2, be2, rm2, rv2)
    max_err = float(jnp.max(jnp.abs(out - ref)))
    # layer 1 is f32; layer 2 uses bf16 matmul operands (f32 accumulate) vs an f32
    # HIGHEST reference: expect ~1e-2 worst case.
    assert max_err < 3e-2, f"mismatch vs reference: {max_err}"

    print("KERNEL_OK")
</pallas_src>

<mosaic_0001>
module attributes {stable_mosaic.version = 11 : i64} {
  func.func @kernel(%arg0: i32, %arg1: i32, %arg2: memref<1x2x256xf32, #tpu.memory_space<vmem>>, %arg3: memref<3x32x2xf32, #tpu.memory_space<vmem>>, %arg4: memref<32x1xf32, #tpu.memory_space<vmem>>, %arg5: memref<3x32x32xbf16, #tpu.memory_space<vmem>>, %arg6: memref<32x1xf32, #tpu.memory_space<vmem>>, %arg7: memref<1x32x256xf32, #tpu.memory_space<vmem>>) attributes {dimension_semantics = [#tpu.dimension_semantics<parallel>, #tpu.dimension_semantics<parallel>], iteration_bounds = array<i64: 2, 1>, scalar_prefetch = 0 : i64, scratch_operands = 0 : i64, tpu.core_type = #tpu.core_type<tc>, window_params = [{transform_indices = @transform_0, window_bounds = array<i64: 1, 2, 256>}, {pipeline_mode = #tpu.pipeline_mode<synchronous>, transform_indices = @transform_1, window_bounds = array<i64: 3, 32, 2>}, {pipeline_mode = #tpu.pipeline_mode<synchronous>, transform_indices = @transform_2, window_bounds = array<i64: 32, 1>}, {pipeline_mode = #tpu.pipeline_mode<synchronous>, transform_indices = @transform_3, window_bounds = array<i64: 3, 32, 32>}, {pipeline_mode = #tpu.pipeline_mode<synchronous>, transform_indices = @transform_4, window_bounds = array<i64: 32, 1>}, {transform_indices = @transform_5, window_bounds = array<i64: 1, 32, 256>}]} {
    %0 = tpu.iota {dimensions = array<i32: 1>} : vector<1x256xi32>
    %c16_i32 = arith.constant 16 : i32
    %c0_i32 = arith.constant 0 : i32
    %1 = arith.cmpi eq, %c16_i32, %c0_i32 : i32
    %c1_i32 = arith.constant 1 : i32
    %2 = arith.select %1, %c1_i32, %c16_i32 : i32
    %3 = vector.broadcast %2 : i32 to vector<1x256xi32>
    %4 = arith.remsi %0, %3 : vector<1x256xi32>
    %c0_i32_0 = arith.constant 0 : i32
    %5 = vector.broadcast %c0_i32_0 : i32 to vector<1x256xi32>
    %6 = arith.cmpi ne, %4, %5 : vector<1x256xi32>
    %c0_i32_1 = arith.constant 0 : i32
    %7 = vector.broadcast %c0_i32_1 : i32 to vector<1x256xi32>
    %8 = arith.cmpi slt, %4, %7 : vector<1x256xi32>
    %c0_i32_2 = arith.constant 0 : i32
    %9 = arith.cmpi slt, %2, %c0_i32_2 : i32
    %10 = vector.broadcast %9 : i1 to vector<1x256xi1>
    %11 = vector.broadcast %10 : vector<1x256xi1> to vector<1x256xi1>
    %12 = arith.xori %8, %11 : vector<1x256xi1>
    %13 = arith.andi %12, %6 : vector<1x256xi1>
    %14 = vector.broadcast %2 : i32 to vector<1x256xi32>
    %15 = arith.addi %4, %14 : vector<1x256xi32>
    %16 = arith.select %13, %15, %4 : vector<1x256xi1>, vector<1x256xi32>
    %c0_i32_3 = arith.constant 0 : i32
    %17 = vector.broadcast %c0_i32_3 : i32 to vector<1x256xi32>
    %18 = arith.cmpi ne, %16, %17 : vector<1x256xi32>
    %c15_i32 = arith.constant 15 : i32
    %19 = vector.broadcast %c15_i32 : i32 to vector<1x256xi32>
    %20 = arith.cmpi ne, %16, %19 : vector<1x256xi32>
    %c0 = arith.constant 0 : index
    %c0_4 = arith.constant 0 : index
    %c0_5 = arith.constant 0 : index
    %21 = vector.load %arg2[%c0, %c0_4, %c0_5] : memref<1x2x256xf32, #tpu.memory_space<vmem>>, vector<1x2x256xf32>
    %22 = vector.shape_cast %21 : vector<1x2x256xf32> to vector<2x256xf32>
    %c0_6 = arith.constant 0 : index
    %c0_7 = arith.constant 0 : index
    %c0_8 = arith.constant 0 : index
    %23 = vector.load %arg3[%c0_6, %c0_7, %c0_8] : memref<3x32x2xf32, #tpu.memory_space<vmem>>, vector<1x32x2xf32>
    %24 = vector.shape_cast %23 : vector<1x32x2xf32> to vector<32x2xf32>
    %cst = arith.constant dense<0.000000e+00> : vector<32x256xf32>
    %25 = tpu.matmul %24, %22, %cst {dimension_numbers = #tpu.dot_dimension_numbers<[1], [0], [0], [1], [0, 0, 1, 1], [], []>} : vector<32x2xf32>, vector<2x256xf32>, vector<32x256xf32> -> vector<32x256xf32>
    %c1 = arith.constant 1 : index
    %c0_9 = arith.constant 0 : index
    %c0_10 = arith.constant 0 : index
    %26 = vector.load %arg3[%c1, %c0_9, %c0_10] : memref<3x32x2xf32, #tpu.memory_space<vmem>>, vector<1x32x2xf32>
    %27 = vector.shape_cast %26 : vector<1x32x2xf32> to vector<32x2xf32>
    %cst_11 = arith.constant dense<0.000000e+00> : vector<32x256xf32>
    %28 = tpu.matmul %27, %22, %cst_11 {dimension_numbers = #tpu.dot_dimension_numbers<[1], [0], [0], [1], [0, 0, 1, 1], [], []>} : vector<32x2xf32>, vector<2x256xf32>, vector<32x256xf32> -> vector<32x256xf32>
    %c2 = arith.constant 2 : index
    %c0_12 = arith.constant 0 : index
    %c0_13 = arith.constant 0 : index
    %29 = vector.load %arg3[%c2, %c0_12, %c0_13] : memref<3x32x2xf32, #tpu.memory_space<vmem>>, vector<1x32x2xf32>
    %30 = vector.shape_cast %29 : vector<1x32x2xf32> to vector<32x2xf32>
    %cst_14 = arith.constant dense<0.000000e+00> : vector<32x256xf32>
    %31 = tpu.matmul %30, %22, %cst_14 {dimension_numbers = #tpu.dot_dimension_numbers<[1], [0], [0], [1], [0, 0, 1, 1], [], []>} : vector<32x2xf32>, vector<2x256xf32>, vector<32x256xf32> -> vector<32x256xf32>
    %c1_i32_15 = arith.constant 1 : i32
    %32 = tpu.dynamic_rotate %25 by %c1_i32_15 dim 1 : vector<32x256xf32>, i32 -> vector<32x256xf32>
    %cst_16 = arith.constant 0.000000e+00 : f32
    %33 = vector.shape_cast %18 : vector<1x256xi1> to vector<1x256xi1>
    %34 = vector.broadcast %33 : vector<1x256xi1> to vector<32x256xi1>
    %35 = vector.broadcast %cst_16 : f32 to vector<32x256xf32>
    %36 = arith.select %34, %32, %35 : vector<32x256xi1>, vector<32x256xf32>
    %c255_i32 = arith.constant 255 : i32
    %37 = tpu.dynamic_rotate %31 by %c255_i32 dim 1 : vector<32x256xf32>, i32 -> vector<32x256xf32>
    %cst_17 = arith.constant 0.000000e+00 : f32
    %38 = vector.shape_cast %20 : vector<1x256xi1> to vector<1x256xi1>
    %39 = vector.broadcast %38 : vector<1x256xi1> to vector<32x256xi1>
    %40 = vector.broadcast %cst_17 : f32 to vector<32x256xf32>
    %41 = arith.select %39, %37, %40 : vector<32x256xi1>, vector<32x256xf32>
    %42 = arith.addf %28, %36 : vector<32x256xf32>
    %43 = arith.addf %42, %41 : vector<32x256xf32>
    %c0_18 = arith.constant 0 : index
    %c0_19 = arith.constant 0 : index
    %44 = vector.load %arg4[%c0_18, %c0_19] : memref<32x1xf32, #tpu.memory_space<vmem>>, vector<32x1xf32>
    %45 = vector.broadcast %44 : vector<32x1xf32> to vector<32x256xf32>
    %46 = arith.addf %43, %45 : vector<32x256xf32>
    %cst_20 = arith.constant 0.000000e+00 : f32
    %47 = vector.broadcast %cst_20 : f32 to vector<32x256xf32>
    %48 = arith.maximumf %46, %47 : vector<32x256xf32>
    %49 = arith.truncf %48 : vector<32x256xf32> to vector<32x256xbf16>
    %c0_21 = arith.constant 0 : index
    %c0_22 = arith.constant 0 : index
    %c0_23 = arith.constant 0 : index
    %50 = vector.load %arg5[%c0_21, %c0_22, %c0_23] : memref<3x32x32xbf16, #tpu.memory_space<vmem>>, vector<1x32x32xbf16>
    %51 = vector.shape_cast %50 : vector<1x32x32xbf16> to vector<32x32xbf16>
    %cst_24 = arith.constant dense<0.000000e+00> : vector<32x256xf32>
    %52 = tpu.matmul %51, %49, %cst_24 {dimension_numbers = #tpu.dot_dimension_numbers<[1], [0], [0], [1], [0, 0, 1, 1], [], []>} : vector<32x32xbf16>, vector<32x256xbf16>, vector<32x256xf32> -> vector<32x256xf32>
    %c1_25 = arith.constant 1 : index
    %c0_26 = arith.constant 0 : index
    %c0_27 = arith.constant 0 : index
    %53 = vector.load %arg5[%c1_25, %c0_26, %c0_27] : memref<3x32x32xbf16, #tpu.memory_space<vmem>>, vector<1x32x32xbf16>
    %54 = vector.shape_cast %53 : vector<1x32x32xbf16> to vector<32x32xbf16>
    %cst_28 = arith.constant dense<0.000000e+00> : vector<32x256xf32>
    %55 = tpu.matmul %54, %49, %cst_28 {dimension_numbers = #tpu.dot_dimension_numbers<[1], [0], [0], [1], [0, 0, 1, 1], [], []>} : vector<32x32xbf16>, vector<32x256xbf16>, vector<32x256xf32> -> vector<32x256xf32>
    %c2_29 = arith.constant 2 : index
    %c0_30 = arith.constant 0 : index
    %c0_31 = arith.constant 0 : index
    %56 = vector.load %arg5[%c2_29, %c0_30, %c0_31] : memref<3x32x32xbf16, #tpu.memory_space<vmem>>, vector<1x32x32xbf16>
    %57 = vector.shape_cast %56 : vector<1x32x32xbf16> to vector<32x32xbf16>
    %cst_32 = arith.constant dense<0.000000e+00> : vector<32x256xf32>
    %58 = tpu.matmul %57, %49, %cst_32 {dimension_numbers = #tpu.dot_dimension_numbers<[1], [0], [0], [1], [0, 0, 1, 1], [], []>} : vector<32x32xbf16>, vector<32x256xbf16>, vector<32x256xf32> -> vector<32x256xf32>
    %c1_i32_33 = arith.constant 1 : i32
    %59 = tpu.dynamic_rotate %52 by %c1_i32_33 dim 1 : vector<32x256xf32>, i32 -> vector<32x256xf32>
    %cst_34 = arith.constant 0.000000e+00 : f32
    %60 = vector.shape_cast %18 : vector<1x256xi1> to vector<1x256xi1>
    %61 = vector.broadcast %60 : vector<1x256xi1> to vector<32x256xi1>
    %62 = vector.broadcast %cst_34 : f32 to vector<32x256xf32>
    %63 = arith.select %61, %59, %62 : vector<32x256xi1>, vector<32x256xf32>
    %c255_i32_35 = arith.constant 255 : i32
    %64 = tpu.dynamic_rotate %58 by %c255_i32_35 dim 1 : vector<32x256xf32>, i32 -> vector<32x256xf32>
    %cst_36 = arith.constant 0.000000e+00 : f32
    %65 = vector.shape_cast %20 : vector<1x256xi1> to vector<1x256xi1>
    %66 = vector.broadcast %65 : vector<1x256xi1> to vector<32x256xi1>
    %67 = vector.broadcast %cst_36 : f32 to vector<32x256xf32>
    %68 = arith.select %66, %64, %67 : vector<32x256xi1>, vector<32x256xf32>
    %69 = arith.addf %55, %63 : vector<32x256xf32>
    %70 = arith.addf %69, %68 : vector<32x256xf32>
    %c0_37 = arith.constant 0 : index
    %c0_38 = arith.constant 0 : index
    %71 = vector.load %arg6[%c0_37, %c0_38] : memref<32x1xf32, #tpu.memory_space<vmem>>, vector<32x1xf32>
    %72 = vector.broadcast %71 : vector<32x1xf32> to vector<32x256xf32>
    %73 = arith.addf %70, %72 : vector<32x256xf32>
    %cst_39 = arith.constant 0.000000e+00 : f32
    %74 = vector.broadcast %cst_39 : f32 to vector<32x256xf32>
    %75 = arith.maximumf %73, %74 : vector<32x256xf32>
    %c0_40 = arith.constant 0 : index
    %c0_41 = arith.constant 0 : index
    %c0_42 = arith.constant 0 : index
    %76 = vector.load %arg7[%c0_40, %c0_41, %c0_42] : memref<1x32x256xf32, #tpu.memory_space<vmem>>, vector<1x32x256xf32>
    %77 = vector.shape_cast %76 : vector<1x32x256xf32> to vector<32x256xf32>
    %78 = vector.shape_cast %75 : vector<32x256xf32> to vector<1x32x256xf32>
    tpu.vector_store %arg7[%c0_40, %c0_41, %c0_42], %78 {strides = array<i32>} : memref<1x32x256xf32, #tpu.memory_space<vmem>>, vector<1x32x256xf32>,
    return
  }
  func.func @transform_0(%arg0: i32, %arg1: i32) -> (i32, i32, i32) {
    %c0_i32 = arith.constant 0 : i32
    %c0_i32_0 = arith.constant 0 : i32
    return %arg0, %c0_i32, %arg1 : i32, i32, i32
  }
  func.func @transform_1(%arg0: i32, %arg1: i32) -> (i32, i32, i32) {
    %c0_i32 = arith.constant 0 : i32
    %c0_i32_0 = arith.constant 0 : i32
    %c0_i32_1 = arith.constant 0 : i32
    %c0_i32_2 = arith.constant 0 : i32
    return %c0_i32, %c0_i32_0, %c0_i32_1 : i32, i32, i32
  }
  func.func @transform_2(%arg0: i32, %arg1: i32) -> (i32, i32) {
    %c0_i32 = arith.constant 0 : i32
    %c0_i32_0 = arith.constant 0 : i32
    %c0_i32_1 = arith.constant 0 : i32
    return %c0_i32, %c0_i32_0 : i32, i32
  }
  func.func @transform_3(%arg0: i32, %arg1: i32) -> (i32, i32, i32) {
    %c0_i32 = arith.constant 0 : i32
    %c0_i32_0 = arith.constant 0 : i32
    %c0_i32_1 = arith.constant 0 : i32
    %c0_i32_2 = arith.constant 0 : i32
    return %c0_i32, %c0_i32_0, %c0_i32_1 : i32, i32, i32
  }
  func.func @transform_4(%arg0: i32, %arg1: i32) -> (i32, i32) {
    %c0_i32 = arith.constant 0 : i32
    %c0_i32_0 = arith.constant 0 : i32
    %c0_i32_1 = arith.constant 0 : i32
    return %c0_i32, %c0_i32_0 : i32, i32
  }
  func.func @transform_5(%arg0: i32, %arg1: i32) -> (i32, i32, i32) {
    %c0_i32 = arith.constant 0 : i32
    %c0_i32_0 = arith.constant 0 : i32
    return %arg0, %c0_i32, %arg1 : i32, i32, i32
  }
}

</mosaic_0001>

<llo_original>
// kernel: cnn_forward.1
$region0: #{cnn_forward.1}
  #allocation0 [shape = 'u32[]', space=smem, size = 0x4, offset = 0x4, fixed_abs, tag = 'smem constant byte address 0x4 - core index']
  #allocation1 [shape = 'u32[144,128]{1,0:T(1,128)}', space=vmem, size = 0x12000, scoped, tag = 'internal scratch']
  %s0 = inlined_call_operand.vmem [shape: f32[2,2,256], index: 0, kind: input, shape index: {}]
  %s1 = inlined_call_operand.vmem [shape: f32[3,32,2], index: 1, kind: input, shape index: {}]
  %s2 = inlined_call_operand.vmem [shape: f32[32,1], index: 2, kind: input, shape index: {}]
  %s3 = inlined_call_operand.vmem [shape: bf16[3,32,32], index: 3, kind: input, shape index: {}]
  %s4 = inlined_call_operand.vmem [shape: f32[32,1], index: 4, kind: input, shape index: {}]
  %s5 = inlined_call_operand.vmem [shape: f32[2,32,256], index: 5, kind: output, shape index: {}]
  %s6 = sld [smem:[#allocation0]]
  $region53: #{cnn_forward.1} parent=0
    _
  %s8 = ssub.s32 1, %s6
  %s9 = scalar_select 0, %s8, %s6
  loop: start=0, step=1, limit=4
  $region2: #{cnn_forward.1} parent=0 // loop_pre_header
    _
  $region3: #{cnn_forward.1} parent=0 // loop_header
    %s11 = sphi 0, %s15
    %p12 = scmp.ge.s32.totalorder %s11, 4
    %s18 = sphi 0, %s30
    %s19 = sphi 0, %s26
    %s20 = sphi 0, %s18
    %s21 = sphi 0, %s19
    %s22 = sphi 0, %s20
    %s23 = sphi 0, %s21
    %s35 = sphi 0, %s37
    %s38 = sphi 0, %s35
    %s39 = sphi 0, %s38
    %s55 = sphi 0, %s39
    %s59 = sphi 0, %s59
    %s61 = sphi 0, %s59
    %s62 = sphi 0, %s61
    %s76 = sphi 0, %s62
    %s80 = sphi 0, %s80
    %s82 = sphi 0, %s80
    %s83 = sphi 0, %s82
    %s97 = sphi 0, %s83
    %s101 = sphi 0, %s101
    %s103 = sphi 0, %s101
    %s104 = sphi 0, %s103
    %s118 = sphi 0, %s104
    %s122 = sphi 0, %s122
    %s124 = sphi 0, %s122
    %s125 = sphi 0, %s124
    %s139 = sphi 0, %s125
    %s147 = sphi 0, %s149
    %s150 = sphi 0, %s147
    %s151 = sphi 0, %s150
    %s167 = sphi 0, %s151
  $region4: #{cnn_forward.1} parent=0 // loop_header_branch
    %14 = sbr.rel (%p12) target = $region8
  $region5: #{cnn_forward.1} parent=0 // loop_body
    %s16 = ssub.s32 %s11, 1
    %s17 = ssub.s32 %s11, 2
    %s24 = sadd.s32 1, %s19
    %p25 = scmp.ge.s32.totalorder %s24, 1
    %s26 = scalar_select %p25, 0, %s24
    %s27 = sadd.s32 1, %s18
    %s28 = scalar_select %p25, %s27, %s18
    %p29 = scmp.ge.s32.totalorder %s28, 2
    %s30 = scalar_select %p29, 0, %s28
    %s31 = ssub.s32 %s18, %s30
    %s32 = ssub.s32 %s19, %s26
    %s33 = sor.u32 %s31, %s32
    %p34 = scmp.eq.s32.totalorder %s33, 0
    %s36 = sadd.s32 %s35, 1
    %s37 = scalar_select %p34, %s35, %s36
    %p40 = pneg %p34
    %p41 = scmp.eq.s32.totalorder %s11, 1
    %p42 = por %p40, %p41
    %p43 = scmp.ne.s32.totalorder %s35, %s38
    %p44 = scmp.eq.s32.totalorder %s11, 0
    %p45 = por %p43, %p44
    %p46 = scmp.ne.s32.totalorder %s35, %s38
    %p47 = scmp.eq.s32.totalorder %s16, 1
    %p48 = por %p46, %p47
    %p49 = scmp.ne.s32.totalorder %s38, %s39
    %p50 = scmp.eq.s32.totalorder %s16, 0
    %p51 = por %p49, %p50
    %p52 = scmp.ne.s32.totalorder %s38, %s39
    %p53 = scmp.eq.s32.totalorder %s17, 1
    %p54 = por %p52, %p53
    %p56 = scmp.ne.s32.totalorder %s39, %s55
    %p57 = scmp.eq.s32.totalorder %s17, 0
    %p58 = por %p56, %p57
    %s60 = sadd.s32 %s59, 1
    %p63 = scmp.eq.s32.totalorder %s11, 1
    %p64 = scmp.ne.s32.totalorder %s59, %s61
    %p65 = scmp.eq.s32.totalorder %s11, 0
    %p66 = por %p64, %p65
    %p67 = scmp.ne.s32.totalorder %s59, %s61
    %p68 = scmp.eq.s32.totalorder %s16, 1
    %p69 = por %p67, %p68
    %p70 = scmp.ne.s32.totalorder %s61, %s62
    %p71 = scmp.eq.s32.totalorder %s16, 0
    %p72 = por %p70, %p71
    %p73 = scmp.ne.s32.totalorder %s61, %s62
    %p74 = scmp.eq.s32.totalorder %s17, 1
    %p75 = por %p73, %p74
    %p77 = scmp.ne.s32.totalorder %s62, %s76
    %p78 = scmp.eq.s32.totalorder %s17, 0
    %p79 = por %p77, %p78
    %s81 = sadd.s32 %s80, 1
    %p84 = scmp.eq.s32.totalorder %s11, 1
    %p85 = scmp.ne.s32.totalorder %s80, %s82
    %p86 = scmp.eq.s32.totalorder %s11, 0
    %p87 = por %p85, %p86
    %p88 = scmp.ne.s32.totalorder %s80, %s82
    %p89 = scmp.eq.s32.totalorder %s16, 1
    %p90 = por %p88, %p89
    %p91 = scmp.ne.s32.totalorder %s82, %s83
    %p92 = scmp.eq.s32.totalorder %s16, 0
    %p93 = por %p91, %p92
    %p94 = scmp.ne.s32.totalorder %s82, %s83
    %p95 = scmp.eq.s32.totalorder %s17, 1
    %p96 = por %p94, %p95
    %p98 = scmp.ne.s32.totalorder %s83, %s97
    %p99 = scmp.eq.s32.totalorder %s17, 0
    %p100 = por %p98, %p99
    %s102 = sadd.s32 %s101, 1
    %p105 = scmp.eq.s32.totalorder %s11, 1
    %p106 = scmp.ne.s32.totalorder %s101, %s103
    %p107 = scmp.eq.s32.totalorder %s11, 0
    %p108 = por %p106, %p107
    %p109 = scmp.ne.s32.totalorder %s101, %s103
    %p110 = scmp.eq.s32.totalorder %s16, 1
    %p111 = por %p109, %p110
    %p112 = scmp.ne.s32.totalorder %s103, %s104
    %p113 = scmp.eq.s32.totalorder %s16, 0
    %p114 = por %p112, %p113
    %p115 = scmp.ne.s32.totalorder %s103, %s104
    %p116 = scmp.eq.s32.totalorder %s17, 1
    %p117 = por %p115, %p116
    %p119 = scmp.ne.s32.totalorder %s104, %s118
    %p120 = scmp.eq.s32.totalorder %s17, 0
    %p121 = por %p119, %p120
    %s123 = sadd.s32 %s122, 1
    %p126 = scmp.eq.s32.totalorder %s11, 1
    %p127 = scmp.ne.s32.totalorder %s122, %s124
    %p128 = scmp.eq.s32.totalorder %s11, 0
    %p129 = por %p127, %p128
    %p130 = scmp.ne.s32.totalorder %s122, %s124
    %p131 = scmp.eq.s32.totalorder %s16, 1
    %p132 = por %p130, %p131
    %p133 = scmp.ne.s32.totalorder %s124, %s125
    %p134 = scmp.eq.s32.totalorder %s16, 0
    %p135 = por %p133, %p134
    %p136 = scmp.ne.s32.totalorder %s124, %s125
    %p137 = scmp.eq.s32.totalorder %s17, 1
    %p138 = por %p136, %p137
    %p140 = scmp.ne.s32.totalorder %s125, %s139
    %p141 = scmp.eq.s32.totalorder %s17, 0
    %p142 = por %p140, %p141
    %s143 = ssub.s32 %s18, %s30
    %s144 = ssub.s32 %s19, %s26
    %s145 = sor.u32 %s143, %s144
    %p146 = scmp.eq.s32.totalorder %s145, 0
    %s148 = sadd.s32 %s147, 1
    %s149 = scalar_select %p146, %s147, %s148
    %p152 = pneg %p146
    %p153 = scmp.eq.s32.totalorder %s11, 1
    %p154 = por %p152, %p153
    %p155 = scmp.ne.s32.totalorder %s147, %s150
    %p156 = scmp.eq.s32.totalorder %s11, 0
    %p157 = por %p155, %p156
    %p158 = scmp.ne.s32.totalorder %s147, %s150
    %p159 = scmp.eq.s32.totalorder %s16, 1
    %p160 = por %p158, %p159
    %p161 = scmp.ne.s32.totalorder %s150, %s151
    %p162 = scmp.eq.s32.totalorder %s16, 0
    %p163 = por %p161, %p162
    %p164 = scmp.ne.s32.totalorder %s150, %s151
    %p165 = scmp.eq.s32.totalorder %s17, 1
    %p166 = por %p164, %p165
    %p168 = scmp.ne.s32.totalorder %s151, %s167
    %p169 = scmp.eq.s32.totalorder %s17, 0
    %p170 = por %p168, %p169
    %p171 = scmp.le.s32.totalorder 1, %s11
    %p172 = scmp.lt.s32.totalorder %s11, 3
    %p173 = pnand %p171, %p172
    %p174 = pneg %p173
    // Predicated region
    $region9: #{cnn_forward.1} parent=5 // pred_check
      _
    $region10: #{cnn_forward.1} parent=5 // pred_check_branch
      %176 = sbr.rel (%p173) target = $region12
    $region11: #{cnn_forward.1} parent=5 // pred_region
      %s177 = ssub.s32 %s11, 1
      // Predicated region
      $region13: #{cnn_forward.1} parent=11 // pred_check
        %p178 = pneg %p72
      $region14: #{cnn_forward.1} parent=11 // pred_check_branch
        %180 = sbr.rel (%p178) target = $region16
      $region15: #{cnn_forward.1} parent=11 // pred_region
        _
      $region16: #{cnn_forward.1} parent=11 // pred_fallthru
        _
      // Predicated region
      $region17: #{cnn_forward.1} parent=11 // pred_check
        %p181 = pneg %p93
      $region18: #{cnn_forward.1} parent=11 // pred_check_branch
        %183 = sbr.rel (%p181) target = $region20
      $region19: #{cnn_forward.1} parent=11 // pred_region
        _
      $region20: #{cnn_forward.1} parent=11 // pred_fallthru
        _
      // Predicated region
      $region21: #{cnn_forward.1} parent=11 // pred_check
        %p184 = pneg %p114
      $region22: #{cnn_forward.1} parent=11 // pred_check_branch
        %186 = sbr.rel (%p184) target = $region24
      $region23: #{cnn_forward.1} parent=11 // pred_region
        _
      $region24: #{cnn_forward.1} parent=11 // pred_fallthru
        _
      // Predicated region
      $region25: #{cnn_forward.1} parent=11 // pred_check
        %p187 = pneg %p135
      $region26: #{cnn_forward.1} parent=11 // pred_check_branch
        %189 = sbr.rel (%p187) target = $region28
      $region27: #{cnn_forward.1} parent=11 // pred_region
        _
      $region28: #{cnn_forward.1} parent=11 // pred_fallthru
        _
    $region12: #{cnn_forward.1} parent=5 // pred_fallthru
      _
    %p190 = scmp.lt.s32.totalorder %s11, 2
    // Predicated region
    $region29: #{cnn_forward.1} parent=5 // pred_check
      %p191 = pneg %p190
    $region30: #{cnn_forward.1} parent=5 // pred_check_branch
      %193 = sbr.rel (%p191) target = $region32
    $region31: #{cnn_forward.1} parent=5 // pred_region
      // Predicated region
      $region33: #{cnn_forward.1} parent=31 // pred_check
        %p194 = pneg %p45
      $region34: #{cnn_forward.1} parent=31 // pred_check_branch
        %196 = sbr.rel (%p194) target = $region36
      $region35: #{cnn_forward.1} parent=31 // pred_region
        %s197 = smul.u32 2, %s19
        %p198 = scmp.lt.s32.totalorder %s18, 1
        %s199 = scalar_select %p198, %s18, 1
        %p200 = scmp.lt.s32.totalorder %s197, 1
        %s201 = scalar_select %p200, %s197, 1
        %s202 = smul.addr %s199, 2
        %s203 = sadd.s32 %s201, %s202
        %s204 = smul.addr %s203, 2
        %s205 = scalar_lea.vmem %s0, %s204
        %s206 = smul.u32 2, %s19
      $region36: #{cnn_forward.1} parent=31 // pred_fallthru
        _
    $region32: #{cnn_forward.1} parent=5 // pred_fallthru
      _
    %p207 = scmp.le.s32.totalorder 1, %s11
    %p208 = scmp.lt.s32.totalorder %s11, 3
    %p209 = pnand %p207, %p208
    %p210 = pneg %p209
    // Predicated region
    $region37: #{cnn_forward.1} parent=5 // pred_check
      _
    $region38: #{cnn_forward.1} parent=5 // pred_check_branch
      %212 = sbr.rel (%p209) target = $region40
    $region39: #{cnn_forward.1} parent=5 // pred_region
      %s213 = ssub.s32 %s11, 1
      %s214 = smul.u32 2, %s21
      %p215 = scmp.lt.s32.totalorder %s20, 1
      %s216 = scalar_select %p215, %s20, 1
      %p217 = scmp.lt.s32.totalorder %s214, 1
      %s218 = scalar_select %p217, %s214, 1
      %s219 = smul.addr %s216, 2
      %s220 = sadd.s32 %s218, %s219
      %s221 = smul.addr %s220, 2
      %s222 = scalar_lea.vmem %s0, %s221
      %p223 = pneg %p51
      %p224 = pneg %p48
      %p225 = pneg %p72
      %p226 = pneg %p69
      %p227 = pneg %p93
      %p228 = pneg %p90
      %p229 = pneg %p114
      %p230 = pneg %p111
      %p231 = pneg %p135
      %p232 = pneg %p132
      %p233 = pneg %p163
      %p234 = pneg %p160
      %s235 = smul.u32 2, %s21
      %p236 = scmp.lt.s32.totalorder %s20, 1
      %s237 = scalar_select %p236, %s20, 1
      %p238 = scmp.lt.s32.totalorder %s235, 1
      %s239 = scalar_select %p238, %s235, 1
      %s240 = smul.addr %s237, 8
      %s241 = sadd.s32 %s239, %s240
      %s242 = smul.addr %s241, 8
      %s243 = scalar_lea.vmem %s5, %s242
      %s244 = smul.u32 2, %s21
      %p245 = scmp.lt.s32.totalorder %s20, 1
      %s246 = scalar_select %p245, %s20, 1
      %p247 = scmp.lt.s32.totalorder %s244, 1
      %s248 = scalar_select %p247, %s244, 1
      %s249 = smul.addr %s246, 2
      %s250 = sadd.s32 %s248, %s249
      %s251 = smul.addr %s250, 2
      %s252 = scalar_lea.vmem %s0, %s251
      %s253 = smul.u32 2, %s21
      %s254 = smul.u32 2, %s21
      %p255 = scmp.lt.s32.totalorder %s20, 1
      %s256 = scalar_select %p255, %s20, 1
      %p257 = scmp.lt.s32.totalorder %s254, 1
      %s258 = scalar_select %p257, %s254, 1
      %s259 = smul.addr %s256, 8
      %s260 = sadd.s32 %s258, %s259
      %s261 = smul.addr %s260, 8
      %s262 = scalar_lea.vmem %s5, %s261
      %s263 = smul.u32 2, %s21
      %v265 = vlaneseq
      %v266 = vand.u32 %v265, 127
      %v267 = vadd.s32 %v266, 128
      %vm268 = vcmp.lt.s32.totalorder %v266, 0
      %v269 = vsub.s32 0, %v266
      %v270 = vsel %vm268, %v269, %v266
      %v271 = vshrl.u32 %v270, 4
      %v272 = vand.u32 %v270, 15
      %v273 = vsub.s32 0, %v272
      %v274 = vsel %vm268, %v273, %v272
      %vm275 = vcmp.lt.s32.totalorder %v267, 0
      %v276 = vsub.s32 0, %v267
      %v277 = vsel %vm275, %v276, %v267
      %v278 = vshrl.u32 %v277, 4
      %v279 = vand.u32 %v277, 15
      %v280 = vsub.s32 0, %v279
      %v281 = vsel %vm275, %v280, %v279
      %vm282 = vcmp.ne.s32.totalorder %v274, 0
      %vm283 = vcmp.ne.s32.totalorder %v281, 0
      %vm284 = vcmp.lt.s32.totalorder %v274, 0
      %vm285 = vcmp.lt.s32.totalorder %v281, 0
      %vm286 = vmand %vm284, %vm282
      %vm287 = vmand %vm285, %vm283
      %v288 = vadd.s32 %v274, 16
      %v289 = vadd.s32 %v281, 16
      %v290 = vsel %vm286, %v288, %v274
      %v291 = vsel %vm287, %v289, %v281
      %vm292 = vcmp.ne.s32.totalorder %v290, 0
      %vm293 = vcmp.ne.s32.totalorder %v291, 0
      %vm294 = vcmp.ne.s32.totalorder %v290, 15
      %vm295 = vcmp.ne.s32.totalorder %v291, 15
      %v296 = vld [vmem:[%s252] sm:$0xf]
      %v297 = vld [vmem:[%s1] sm:$0xff]
      %v298 = vld [vmem:[%s1 + $0x8] sm:$0xff]
      %v299 = vld [vmem:[%s1 + $0x10] sm:$0xff]
      %v300 = vld [vmem:[%s1 + $0x18] sm:$0xff]
      %v303 = vunpack.c.l.s4 1983009808
      %v304 = vunpack.c.0.s8 %v303
      %v305 = vlaneseq
      %v306 = vshrl.u32 %v305, 7
      %v307 = vsub.s32 %v304, %v306
      %v308 = vrot.slane %v296, %v307
      %v309 = vcombine.high %v308, %v308
      %vm310 = vcmask 15360
      %v312 = vsel %vm310, %v297, 0
      %v315 = vsel %vm310, %v298, 0
      %v318 = vsel %vm310, %v299, 0
      %v321 = vsel %vm310, %v300, 0
      %vm323 = vcmask 1041408
      %v324 = vsel %vm323, %v308, 0
      %v326 = vsel %vm323, %v309, 0
      %328 = vmatprep.subr.mxu0 0.0
      %329 = vmatpush1.msra.mxu0 0.0
      %330 = vmatprep.subr.mxu0 0.0
      %331 = vmatpush1.msra.mxu0 0.0
      %332 = vmatprep.subr.mxu0 0.0
      %333 = vmatpush1.msra.mxu0 0.0
      %334 = vmatprep.subr.mxu0 0.0
      %335 = vmatpush1.msra.mxu0 0.0
      %336 = vmatprep.subr.mxu0 0.0
      %337 = vmatpush1.msra.mxu0 0.0
      %338 = vmatprep.subr.mxu0 0.0
      %339 = vmatpush1.msra.mxu0 0.0
      %340 = vmatprep.subr.mxu0 0.0
      %341 = vmatpush1.msra.mxu0 0.0
      %342 = vmatprep.subr.mxu0 0.0
      %343 = vmatpush1.msra.mxu0 0.0
      %344 = vmatprep.subr.mxu0 0.0
      %345 = vmatpush1.msra.mxu0 0.0
      %346 = vmatprep.subr.mxu0 0.0
      %347 = vmatpush1.msra.mxu0 0.0
      %348 = vmatprep.subr.mxu0 0.0
      %349 = vmatpush1.msra.mxu0 0.0
      %350 = vmatprep.subr.mxu0 0.0
      %351 = vmatpush1.msra.mxu0 0.0
      %352 = vmatprep.subr.mxu0 0.0
      %353 = vmatpush1.msra.mxu0 0.0
      %354 = vmatprep.subr.mxu0 0.0
      %355 = vmatpush1.msra.mxu0 0.0
      %356 = vmatprep.subr.mxu0 0.0
      %357 = vmatpush1.msra.mxu0 0.0
      %358 = vmatprep.subr.mxu0 %v326
      %359 = vmatpush1.msra.mxu0 %v324
      %360 = vmatprep.subr.mxu0 0.0
      %361 = vmatpush2.msra.mxu0 0.0
      %362 = vmatprep.subr.mxu0 0.0
      %363 = vmatpush2.msra.mxu0 0.0
      %364 = vmatprep.subr.mxu0 0.0
      %365 = vmatpush2.msra.mxu0 0.0
      %366 = vmatprep.subr.mxu0 0.0
      %367 = vmatpush2.msra.mxu0 0.0
      %368 = vmatprep.subr.mxu0 0.0
      %369 = vmatpush2.msra.mxu0 0.0
      %370 = vmatprep.subr.mxu0 0.0
      %371 = vmatpush2.msra.mxu0 0.0
      %372 = vmatprep.subr.mxu0 0.0
      %373 = vmatpush2.msra.mxu0 0.0
      %374 = vmatprep.subr.mxu0 0.0
      %375 = vmatpush2.msra.mxu0 0.0
      %376 = vmatprep.subr.mxu0 0.0
      %377 = vmatpush2.msra.mxu0 0.0
      %378 = vmatprep.subr.mxu0 0.0
      %379 = vmatpush2.msra.mxu0 0.0
      %380 = vmatprep.subr.mxu0 0.0
      %381 = vmatpush2.msra.mxu0 0.0
      %382 = vmatprep.subr.mxu0 0.0
      %383 = vmatpush2.msra.mxu0 0.0
      %384 = vmatprep.subr.mxu0 0.0
      %385 = vmatpush2.msra.mxu0 0.0
      %386 = vmatprep.subr.mxu0 0.0
      %387 = vmatpush2.msra.mxu0 0.0
      %388 = vmatprep.subr.mxu0 0.0
      %389 = vmatpush2.msra.mxu0 0.0
      %390 = vmatprep.subr.mxu0 0.0
      %391 = vmatpush2.msra.mxu0 0.0
      %392 = vmatprep.mubr.f32.mxu0 0.0
      %393 = vmatmul.mubr.f32.gmra.mxu0 %v312
      %v394 = vpop.f32.mrf.mxu0
      %v395 = vadd.f32 0.0, %v394
      %v396 = vpop.f32.mrf.mxu0
      %v397 = vadd.f32 0.0, %v396
      %398 = vmatprep.mubr.f32.mxu0 0.0
      %399 = vmatmul.mubr.f32.gmra.mxu0 %v315
      %v400 = vpop.f32.mrf.mxu0
      %v401 = vadd.f32 0.0, %v400
      %v402 = vpop.f32.mrf.mxu0
      %v403 = vadd.f32 0.0, %v402
      %404 = vmatprep.mubr.f32.mxu0 0.0
      %405 = vmatmul.mubr.f32.gmra.mxu0 %v318
      %v406 = vpop.f32.mrf.mxu0
      %v407 = vadd.f32 0.0, %v406
      %v408 = vpop.f32.mrf.mxu0
      %v409 = vadd.f32 0.0, %v408
      %410 = vmatprep.mubr.f32.mxu0 0.0
      %411 = vmatmul.mubr.f32.gmra.mxu0 %v321
      %v412 = vpop.f32.mrf.mxu0
      %v413 = vadd.f32 0.0, %v412
      %v414 = vpop.f32.mrf.mxu0
      %v415 = vadd.f32 0.0, %v414
      %416 = vdwg.mxu0
      %s417 = scalar_lea.vmem %s1, 32
      %v418 = vld [vmem:[%s417] sm:$0xff]
      %v419 = vld [vmem:[%s417 + $0x8] sm:$0xff]
      %v420 = vld [vmem:[%s417 + $0x10] sm:$0xff]
      %v421 = vld [vmem:[%s417 + $0x18] sm:$0xff]
      %s422 = scalar_lea.vmem %s1, 64
      %v423 = vld [vmem:[%s422] sm:$0xff]
      %v424 = vld [vmem:[%s422 + $0x8] sm:$0xff]
      %v425 = vld [vmem:[%s422 + $0x10] sm:$0xff]
      %v426 = vld [vmem:[%s422 + $0x18] sm:$0xff]
      %v428 = vsel %vm310, %v423, 0
      %v431 = vsel %vm310, %v424, 0
      %v434 = vsel %vm310, %v425, 0
      %v437 = vsel %vm310, %v426, 0
      %439 = vmatprep.subr.mxu0 0.0
      %440 = vmatpush1.msra.mxu0 0.0
      %441 = vmatprep.subr.mxu0 0.0
      %442 = vmatpush1.msra.mxu0 0.0
      %443 = vmatprep.subr.mxu0 0.0
      %444 = vmatpush1.msra.mxu0 0.0
      %445 = vmatprep.subr.mxu0 0.0
      %446 = vmatpush1.msra.mxu0 0.0
      %447 = vmatprep.subr.mxu0 0.0
      %448 = vmatpush1.msra.mxu0 0.0
      %449 = vmatprep.subr.mxu0 0.0
      %450 = vmatpush1.msra.mxu0 0.0
      %451 = vmatprep.subr.mxu0 0.0
      %452 = vmatpush1.msra.mxu0 0.0
      %453 = vmatprep.subr.mxu0 0.0
      %454 = vmatpush1.msra.mxu0 0.0
      %455 = vmatprep.subr.mxu0 0.0
      %456 = vmatpush1.msra.mxu0 0.0
      %457 = vmatprep.subr.mxu0 0.0
      %458 = vmatpush1.msra.mxu0 0.0
      %459 = vmatprep.subr.mxu0 0.0
      %460 = vmatpush1.msra.mxu0 0.0
      %461 = vmatprep.subr.mxu0 0.0
      %462 = vmatpush1.msra.mxu0 0.0
      %463 = vmatprep.subr.mxu0 0.0
      %464 = vmatpush1.msra.mxu0 0.0
      %465 = vmatprep.subr.mxu0 0.0
      %466 = vmatpush1.msra.mxu0 0.0
      %467 = vmatprep.subr.mxu0 0.0
      %468 = vmatpush1.msra.mxu0 0.0
      %469 = vmatprep.subr.mxu0 %v326
      %470 = vmatpush1.msra.mxu0 %v324
      %471 = vmatprep.subr.mxu0 0.0
      %472 = vmatpush2.msra.mxu0 0.0
      %473 = vmatprep.subr.mxu0 0.0
      %474 = vmatpush2.msra.mxu0 0.0
      %475 = vmatprep.subr.mxu0 0.0
      %476 = vmatpush2.msra.mxu0 0.0
      %477 = vmatprep.subr.mxu0 0.0
      %478 = vmatpush2.msra.mxu0 0.0
      %479 = vmatprep.subr.mxu0 0.0
      %480 = vmatpush2.msra.mxu0 0.0
      %481 = vmatprep.subr.mxu0 0.0
      %482 = vmatpush2.msra.mxu0 0.0
      %483 = vmatprep.subr.mxu0 0.0
      %484 = vmatpush2.msra.mxu0 0.0
      %485 = vmatprep.subr.mxu0 0.0
      %486 = vmatpush2.msra.mxu0 0.0
      %487 = vmatprep.subr.mxu0 0.0
      %488 = vmatpush2.msra.mxu0 0.0
      %489 = vmatprep.subr.mxu0 0.0
      %490 = vmatpush2.msra.mxu0 0.0
      %491 = vmatprep.subr.mxu0 0.0
      %492 = vmatpush2.msra.mxu0 0.0
      %493 = vmatprep.subr.mxu0 0.0
      %494 = vmatpush2.msra.mxu0 0.0
      %495 = vmatprep.subr.mxu0 0.0
      %496 = vmatpush2.msra.mxu0 0.0
      %497 = vmatprep.subr.mxu0 0.0
      %498 = vmatpush2.msra.mxu0 0.0
      %499 = vmatprep.subr.mxu0 0.0
      %500 = vmatpush2.msra.mxu0 0.0
      %501 = vmatprep.subr.mxu0 0.0
      %502 = vmatpush2.msra.mxu0 0.0
      %503 = vmatprep.mubr.f32.mxu0 0.0
      %504 = vmatmul.mubr.f32.gmra.mxu0 %v428
      %v505 = vpop.f32.mrf.mxu0
      %v506 = vadd.f32 0.0, %v505
      %v507 = vpop.f32.mrf.mxu0
      %v508 = vadd.f32 0.0, %v507
      %509 = vmatprep.mubr.f32.mxu0 0.0
      %510 = vmatmul.mubr.f32.gmra.mxu0 %v431
      %v511 = vpop.f32.mrf.mxu0
      %v512 = vadd.f32 0.0, %v511
      %v513 = vpop.f32.mrf.mxu0
      %v514 = vadd.f32 0.0, %v513
      %515 = vmatprep.mubr.f32.mxu0 0.0
      %516 = vmatmul.mubr.f32.gmra.mxu0 %v434
      %v517 = vpop.f32.mrf.mxu0
      %v518 = vadd.f32 0.0, %v517
      %v519 = vpop.f32.mrf.mxu0
      %v520 = vadd.f32 0.0, %v519
      %521 = vmatprep.mubr.f32.mxu0 0.0
      %522 = vmatmul.mubr.f32.gmra.mxu0 %v437
      %v523 = vpop.f32.mrf.mxu0
      %v524 = vadd.f32 0.0, %v523
      %v525 = vpop.f32.mrf.mxu0
      %v526 = vadd.f32 0.0, %v525
      %527 = vdwg.mxu0
      %528 = vrot.lane.b32.xlu0 %v395, 1
      %v529 = vpop.permute.xlu0 %528
      %530 = vrot.lane.b32.xlu0 %v401, 1
      %v531 = vpop.permute.xlu0 %530
      %532 = vrot.lane.b32.xlu0 %v407, 1
      %v533 = vpop.permute.xlu0 %532
      %534 = vrot.lane.b32.xlu0 %v413, 1
      %v535 = vpop.permute.xlu0 %534
      %536 = vrot.lane.b32.xlu0 %v397, 1
      %v537 = vpop.permute.xlu0 %536
      %538 = vrot.lane.b32.xlu0 %v403, 1
      %v539 = vpop.permute.xlu0 %538
      %540 = vrot.lane.b32.xlu0 %v409, 1
      %v541 = vpop.permute.xlu0 %540
      %542 = vrot.lane.b32.xlu0 %v415, 1
      %v543 = vpop.permute.xlu0 %542
      %vm544 = vcmp.lt.s32.totalorder %v266, 1
      %v545 = vsel %vm544, %v529, %v537
      %v546 = vsel %vm544, %v531, %v539
      %v547 = vsel %vm544, %v533, %v541
      %v548 = vsel %vm544, %v535, %v543
      %v549 = vsel %vm544, %v537, %v529
      %v550 = vsel %vm544, %v539, %v531
      %v551 = vsel %vm544, %v541, %v533
      %v552 = vsel %vm544, %v543, %v535
      %v553 = vsel %vm292, 1, 0
      %v554 = vsel %vm293, 1, 0
      %vm555 = vcmp.eq.s32.totalorder %v553, 1
      %vm556 = vcmp.eq.s32.totalorder %v554, 1
      %v557 = vsel %vm555, %v549, 0.0
      %v558 = vsel %vm556, %v545, 0.0
      %v559 = vsel %vm555, %v550, 0.0
      %v560 = vsel %vm556, %v546, 0.0
      %v561 = vsel %vm555, %v551, 0.0
      %v562 = vsel %vm556, %v547, 0.0
      %v563 = vsel %vm555, %v552, 0.0
      %v564 = vsel %vm556, %v548, 0.0
      %565 = vrot.lane.b32.xlu0 %v506, 127
      %v566 = vpop.permute.xlu0 %565
      %567 = vrot.lane.b32.xlu0 %v512, 127
      %v568 = vpop.permute.xlu0 %567
      %569 = vrot.lane.b32.xlu0 %v518, 127
      %v570 = vpop.permute.xlu0 %569
      %571 = vrot.lane.b32.xlu0 %v524, 127
      %v572 = vpop.permute.xlu0 %571
      %573 = vrot.lane.b32.xlu0 %v508, 127
      %v574 = vpop.permute.xlu0 %573
      %575 = vrot.lane.b32.xlu0 %v514, 127
      %v576 = vpop.permute.xlu0 %575
      %577 = vrot.lane.b32.xlu0 %v520, 127
      %v578 = vpop.permute.xlu0 %577
      %579 = vrot.lane.b32.xlu0 %v526, 127
      %v580 = vpop.permute.xlu0 %579
      %vm581 = vcmp.lt.s32.totalorder %v266, 127
      %v582 = vsel %vm581, %v566, %v574
      %v583 = vsel %vm581, %v568, %v576
      %v584 = vsel %vm581, %v570, %v578
      %v585 = vsel %vm581, %v572, %v580
      %v586 = vsel %vm581, %v574, %v566
      %v587 = vsel %vm581, %v576, %v568
      %v588 = vsel %vm581, %v578, %v570
      %v589 = vsel %vm581, %v580, %v572
      %v590 = vsel %vm294, 1, 0
      %v591 = vsel %vm295, 1, 0
      %vm592 = vcmp.eq.s32.totalorder %v590, 1
      %vm593 = vcmp.eq.s32.totalorder %v591, 1
      %v594 = vsel %vm592, %v582, 0.0
      %v595 = vsel %vm593, %v586, 0.0
      %v596 = vsel %vm592, %v583, 0.0
      %v597 = vsel %vm593, %v587, 0.0
      %v598 = vsel %vm592, %v584, 0.0
      %v599 = vsel %vm593, %v588, 0.0
      %v600 = vsel %vm592, %v585, 0.0
      %v601 = vsel %vm593, %v589, 0.0
      %v603 = vsel %vm310, %v418, 0
      %v606 = vsel %vm310, %v419, 0
      %v609 = vsel %vm310, %v420, 0
      %v612 = vsel %vm310, %v421, 0
      %614 = vmatprep.subr.mxu0 0.0
      %615 = vmatpush1.msra.mxu0 0.0
      %616 = vmatprep.subr.mxu0 0.0
      %617 = vmatpush1.msra.mxu0 0.0
      %618 = vmatprep.subr.mxu0 0.0
      %619 = vmatpush1.msra.mxu0 0.0
      %620 = vmatprep.subr.mxu0 0.0
      %621 = vmatpush1.msra.mxu0 0.0
      %622 = vmatprep.subr.mxu0 0.0
      %623 = vmatpush1.msra.mxu0 0.0
      %624 = vmatprep.subr.mxu0 0.0
      %625 = vmatpush1.msra.mxu0 0.0
      %626 = vmatprep.subr.mxu0 0.0
      %627 = vmatpush1.msra.mxu0 0.0
      %628 = vmatprep.subr.mxu0 0.0
      %629 = vmatpush1.msra.mxu0 0.0
      %630 = vmatprep.subr.mxu0 0.0
      %631 = vmatpush1.msra.mxu0 0.0
      %632 = vmatprep.subr.mxu0 0.0
      %633 = vmatpush1.msra.mxu0 0.0
      %634 = vmatprep.subr.mxu0 0.0
      %635 = vmatpush1.msra.mxu0 0.0
      %636 = vmatprep.subr.mxu0 0.0
      %637 = vmatpush1.msra.mxu0 0.0
      %638 = vmatprep.subr.mxu0 0.0
      %639 = vmatpush1.msra.mxu0 0.0
      %640 = vmatprep.subr.mxu0 0.0
      %641 = vmatpush1.msra.mxu0 0.0
      %642 = vmatprep.subr.mxu0 0.0
      %643 = vmatpush1.msra.mxu0 0.0
      %644 = vmatprep.subr.mxu0 %v326
      %645 = vmatpush1.msra.mxu0 %v324
      %646 = vmatprep.subr.mxu0 0.0
      %647 = vmatpush2.msra.mxu0 0.0
      %648 = vmatprep.subr.mxu0 0.0
      %649 = vmatpush2.msra.mxu0 0.0
      %650 = vmatprep.subr.mxu0 0.0
      %651 = vmatpush2.msra.mxu0 0.0
      %652 = vmatprep.subr.mxu0 0.0
      %653 = vmatpush2.msra.mxu0 0.0
      %654 = vmatprep.subr.mxu0 0.0
      %655 = vmatpush2.msra.mxu0 0.0
      %656 = vmatprep.subr.mxu0 0.0
      %657 = vmatpush2.msra.mxu0 0.0
      %658 = vmatprep.subr.mxu0 0.0
      %659 = vmatpush2.msra.mxu0 0.0
      %660 = vmatprep.subr.mxu0 0.0
      %661 = vmatpush2.msra.mxu0 0.0
      %662 = vmatprep.subr.mxu0 0.0
      %663 = vmatpush2.msra.mxu0 0.0
      %664 = vmatprep.subr.mxu0 0.0
      %665 = vmatpush2.msra.mxu0 0.0
      %666 = vmatprep.subr.mxu0 0.0
      %667 = vmatpush2.msra.mxu0 0.0
      %668 = vmatprep.subr.mxu0 0.0
      %669 = vmatpush2.msra.mxu0 0.0
      %670 = vmatprep.subr.mxu0 0.0
      %671 = vmatpush2.msra.mxu0 0.0
      %672 = vmatprep.subr.mxu0 0.0
      %673 = vmatpush2.msra.mxu0 0.0
      %674 = vmatprep.subr.mxu0 0.0
      %675 = vmatpush2.msra.mxu0 0.0
      %676 = vmatprep.subr.mxu0 0.0
      %677 = vmatpush2.msra.mxu0 0.0
      %678 = vmatprep.mubr.f32.mxu0 0.0
      %679 = vmatmul.mubr.f32.gmra.mxu0 %v603
      %v680 = vpop.f32.mrf.mxu0
      %v681 = vadd.f32 %v557, %v680
      %v682 = vpop.f32.mrf.mxu0
      %v683 = vadd.f32 %v558, %v682
      %684 = vmatprep.mubr.f32.mxu0 0.0
      %685 = vmatmul.mubr.f32.gmra.mxu0 %v606
      %v686 = vpop.f32.mrf.mxu0
      %v687 = vadd.f32 %v559, %v686
      %v688 = vpop.f32.mrf.mxu0
      %v689 = vadd.f32 %v560, %v688
      %690 = vmatprep.mubr.f32.mxu0 0.0
      %691 = vmatmul.mubr.f32.gmra.mxu0 %v609
      %v692 = vpop.f32.mrf.mxu0
      %v693 = vadd.f32 %v561, %v692
      %v694 = vpop.f32.mrf.mxu0
      %v695 = vadd.f32 %v562, %v694
      %696 = vmatprep.mubr.f32.mxu0 0.0
      %697 = vmatmul.mubr.f32.gmra.mxu0 %v612
      %v698 = vpop.f32.mrf.mxu0
      %v699 = vadd.f32 %v563, %v698
      %v700 = vpop.f32.mrf.mxu0
      %v701 = vadd.f32 %v564, %v700
      %702 = vdwg.mxu0
      %v703 = vadd.f32 %v681, %v594
      %v704 = vadd.f32 %v683, %v595
      %v705 = vadd.f32 %v687, %v596
      %v706 = vadd.f32 %v689, %v597
      %v707 = vadd.f32 %v693, %v598
      %v708 = vadd.f32 %v695, %v599
      %v709 = vadd.f32 %v699, %v600
      %v710 = vadd.f32 %v701, %v601
      %v711 = vld [vmem:[%s2] sm:$0xff]
      %v712 = vld [vmem:[%s2 + $0x8] sm:$0xff]
      %v713 = vld [vmem:[%s2 + $0x10] sm:$0xff]
      %v714 = vld [vmem:[%s2 + $0x18] sm:$0xff]
      %716 = vset.pattern.permute.xlu0 0
      %717 = vperm.xlu0 %716, %v711
      %v718 = vpop.permute.xlu0 %717
      %721 = vset.pattern.permute.xlu0 0
      %722 = vperm.xlu0 %721, %v712
      %v723 = vpop.permute.xlu0 %722
      %726 = vset.pattern.permute.xlu0 0
      %727 = vperm.xlu0 %726, %v713
      %v728 = vpop.permute.xlu0 %727
      %731 = vset.pattern.permute.xlu0 0
      %732 = vperm.xlu0 %731, %v714
      %v733 = vpop.permute.xlu0 %732
      %v735 = vadd.f32 %v703, %v718
      %v736 = vadd.f32 %v704, %v718
      %v737 = vadd.f32 %v705, %v723
      %v738 = vadd.f32 %v706, %v723
      %v739 = vadd.f32 %v707, %v728
      %v740 = vadd.f32 %v708, %v728
      %v741 = vadd.f32 %v709, %v733
      %v742 = vadd.f32 %v710, %v733
      %v743 = vmax.f32 %v735, 0.0
      %v744 = vmax.f32 %v736, 0.0
      %v745 = vmax.f32 %v737, 0.0
      %v746 = vmax.f32 %v738, 0.0
      %v747 = vmax.f32 %v739, 0.0
      %v748 = vmax.f32 %v740, 0.0
      %v749 = vmax.f32 %v741, 0.0
      %v750 = vmax.f32 %v742, 0.0
      %v751 = vpack.c.bf16 %v745, %v743
      %v752 = vpack.c.bf16 %v746, %v744
      %v753 = vpack.c.bf16 %v749, %v747
      %v754 = vpack.c.bf16 %v750, %v748
      %v755 = vld [vmem:[%s3] sm:$0xf]
      %v756 = vld [vmem:[%s3 + $0x4] sm:$0xf]
      %v757 = vld [vmem:[%s3 + $0x8] sm:$0xf]
      %v758 = vld [vmem:[%s3 + $0xc] sm:$0xf]
      %v763 = vunpack.c.l.b16 %v755
      %v764 = vunpack.c.l.b16 %v756
      %v765 = vunpack.c.l.b16 %v757
      %v766 = vunpack.c.l.b16 %v758
      %v767 = vpack.c.b16 %v764, %v763
      %v768 = vpack.c.b16 %v766, %v765
      %vm769 = vcmask 261120
      %v771 = vsel %vm769, %v767, 0
      %v774 = vsel %vm769, %v768, 0
      %776 = vmatprep.subr.bf16.mxu0 0
      %777 = vmatpush1.bf16.msra.mxu0 0
      %778 = vmatprep.subr.bf16.mxu0 0
      %779 = vmatpush1.bf16.msra.mxu0 0
      %780 = vmatprep.subr.bf16.mxu0 0
      %781 = vmatpush1.bf16.msra.mxu0 0
      %782 = vmatprep.subr.bf16.mxu0 0
      %783 = vmatpush1.bf16.msra.mxu0 0
      %784 = vmatprep.subr.bf16.mxu0 0
      %785 = vmatpush1.bf16.msra.mxu0 0
      %786 = vmatprep.subr.bf16.mxu0 0
      %787 = vmatpush1.bf16.msra.mxu0 0
      %788 = vmatprep.subr.bf16.mxu0 %v754
      %789 = vmatpush1.bf16.msra.mxu0 %v753
      %790 = vmatprep.subr.bf16.mxu0 %v752
      %791 = vmatpush1.bf16.msra.mxu0 %v751
      %792 = vmatprep.subr.bf16.mxu0 0
      %793 = vmatpush2.bf16.msra.mxu0 0
      %794 = vmatprep.subr.bf16.mxu0 0
      %795 = vmatpush2.bf16.msra.mxu0 0
      %796 = vmatprep.subr.bf16.mxu0 0
      %797 = vmatpush2.bf16.msra.mxu0 0
      %798 = vmatprep.subr.bf16.mxu0 0
      %799 = vmatpush2.bf16.msra.mxu0 0
      %800 = vmatprep.subr.bf16.mxu0 0
      %801 = vmatpush2.bf16.msra.mxu0 0
      %802 = vmatprep.subr.bf16.mxu0 0
      %803 = vmatpush2.bf16.msra.mxu0 0
      %804 = vmatprep.subr.bf16.mxu0 0
      %805 = vmatpush2.bf16.msra.mxu0 0
      %806 = vmatprep.subr.bf16.mxu0 0
      %807 = vmatpush2.bf16.msra.mxu0 0
      %808 = vmatprep.mubr.bf16.mxu0 0
      %809 = vmatmul.mubr.bf16.gmra.mxu0 %v771
      %v810 = vpop.f32.mrf.mxu0
      %v811 = vadd.f32 0.0, %v810
      %v812 = vpop.f32.mrf.mxu0
      %v813 = vadd.f32 0.0, %v812
      %v814 = vpop.f32.mrf.mxu0
      %v815 = vadd.f32 0.0, %v814
      %v816 = vpop.f32.mrf.mxu0
      %v817 = vadd.f32 0.0, %v816
      %818 = vmatprep.mubr.bf16.mxu0 0
      %819 = vmatmul.mubr.bf16.gmra.mxu0 %v774
      %v820 = vpop.f32.mrf.mxu0
      %v821 = vadd.f32 0.0, %v820
      %v822 = vpop.f32.mrf.mxu0
      %v823 = vadd.f32 0.0, %v822
      %v824 = vpop.f32.mrf.mxu0
      %v825 = vadd.f32 0.0, %v824
      %v826 = vpop.f32.mrf.mxu0
      %v827 = vadd.f32 0.0, %v826
      %828 = vdwg.mxu0
      %s829 = scalar_lea.vmem %s3, 16
      %v830 = vld [vmem:[%s829] sm:$0xf]
      %v831 = vld [vmem:[%s829 + $0x4] sm:$0xf]
      %v832 = vld [vmem:[%s829 + $0x8] sm:$0xf]
      %v833 = vld [vmem:[%s829 + $0xc] sm:$0xf]
      %s834 = scalar_lea.vmem %s3, 32
      %v835 = vld [vmem:[%s834] sm:$0xf]
      %v836 = vld [vmem:[%s834 + $0x4] sm:$0xf]
      %v837 = vld [vmem:[%s834 + $0x8] sm:$0xf]
      %v838 = vld [vmem:[%s834 + $0xc] sm:$0xf]
      %v843 = vunpack.c.l.b16 %v835
      %v844 = vunpack.c.l.b16 %v836
      %v845 = vunpack.c.l.b16 %v837
      %v846 = vunpack.c.l.b16 %v838
      %v847 = vpack.c.b16 %v844, %v843
      %v848 = vpack.c.b16 %v846, %v845
      %v850 = vsel %vm769, %v847, 0
      %v853 = vsel %vm769, %v848, 0
      %855 = vmatprep.subr.bf16.mxu0 0
      %856 = vmatpush1.bf16.msra.mxu0 0
      %857 = vmatprep.subr.bf16.mxu0 0
      %858 = vmatpush1.bf16.msra.mxu0 0
      %859 = vmatprep.subr.bf16.mxu0 0
      %860 = vmatpush1.bf16.msra.mxu0 0
      %861 = vmatprep.subr.bf16.mxu0 0
      %862 = vmatpush1.bf16.msra.mxu0 0
      %863 = vmatprep.subr.bf16.mxu0 0
      %864 = vmatpush1.bf16.msra.mxu0 0
      %865 = vmatprep.subr.bf16.mxu0 0
      %866 = vmatpush1.bf16.msra.mxu0 0
      %867 = vmatprep.subr.bf16.mxu0 %v754
      %868 = vmatpush1.bf16.msra.mxu0 %v753
      %869 = vmatprep.subr.bf16.mxu0 %v752
      %870 = vmatpush1.bf16.msra.mxu0 %v751
      %871 = vmatprep.subr.bf16.mxu0 0
      %872 = vmatpush2.bf16.msra.mxu0 0
      %873 = vmatprep.subr.bf16.mxu0 0
      %874 = vmatpush2.bf16.msra.mxu0 0
      %875 = vmatprep.subr.bf16.mxu0 0
      %876 = vmatpush2.bf16.msra.mxu0 0
      %877 = vmatprep.subr.bf16.mxu0 0
      %878 = vmatpush2.bf16.msra.mxu0 0
      %879 = vmatprep.subr.bf16.mxu0 0
      %880 = vmatpush2.bf16.msra.mxu0 0
      %881 = vmatprep.subr.bf16.mxu0 0
      %882 = vmatpush2.bf16.msra.mxu0 0
      %883 = vmatprep.subr.bf16.mxu0 0
      %884 = vmatpush2.bf16.msra.mxu0 0
      %885 = vmatprep.subr.bf16.mxu0 0
      %886 = vmatpush2.bf16.msra.mxu0 0
      %887 = vmatprep.mubr.bf16.mxu0 0
      %888 = vmatmul.mubr.bf16.gmra.mxu0 %v850
      %v889 = vpop.f32.mrf.mxu0
      %v890 = vadd.f32 0.0, %v889
      %v891 = vpop.f32.mrf.mxu0
      %v892 = vadd.f32 0.0, %v891
      %v893 = vpop.f32.mrf.mxu0
      %v894 = vadd.f32 0.0, %v893
      %v895 = vpop.f32.mrf.mxu0
      %v896 = vadd.f32 0.0, %v895
      %897 = vmatprep.mubr.bf16.mxu0 0
      %898 = vmatmul.mubr.bf16.gmra.mxu0 %v853
      %v899 = vpop.f32.mrf.mxu0
      %v900 = vadd.f32 0.0, %v899
      %v901 = vpop.f32.mrf.mxu0
      %v902 = vadd.f32 0.0, %v901
      %v903 = vpop.f32.mrf.mxu0
      %v904 = vadd.f32 0.0, %v903
      %v905 = vpop.f32.mrf.mxu0
      %v906 = vadd.f32 0.0, %v905
      %907 = vdwg.mxu0
      %908 = vrot.lane.b32.xlu0 %v811, 1
      %v909 = vpop.permute.xlu0 %908
      %910 = vrot.lane.b32.xlu0 %v815, 1
      %v911 = vpop.permute.xlu0 %910
      %912 = vrot.lane.b32.xlu0 %v821, 1
      %v913 = vpop.permute.xlu0 %912
      %914 = vrot.lane.b32.xlu0 %v825, 1
      %v915 = vpop.permute.xlu0 %914
      %916 = vrot.lane.b32.xlu0 %v813, 1
      %v917 = vpop.permute.xlu0 %916
      %918 = vrot.lane.b32.xlu0 %v817, 1
      %v919 = vpop.permute.xlu0 %918
      %920 = vrot.lane.b32.xlu0 %v823, 1
      %v921 = vpop.permute.xlu0 %920
      %922 = vrot.lane.b32.xlu0 %v827, 1
      %v923 = vpop.permute.xlu0 %922
      %v924 = vsel %vm544, %v909, %v917
      %v925 = vsel %vm544, %v911, %v919
      %v926 = vsel %vm544, %v913, %v921
      %v927 = vsel %vm544, %v915, %v923
      %v928 = vsel %vm544, %v917, %v909
      %v929 = vsel %vm544, %v919, %v911
      %v930 = vsel %vm544, %v921, %v913
      %v931 = vsel %vm544, %v923, %v915
      %v932 = vsel %vm555, %v928, 0.0
      %v933 = vsel %vm556, %v924, 0.0
      %v934 = vsel %vm555, %v929, 0.0
      %v935 = vsel %vm556, %v925, 0.0
      %v936 = vsel %vm555, %v930, 0.0
      %v937 = vsel %vm556, %v926, 0.0
      %v938 = vsel %vm555, %v931, 0.0
      %v939 = vsel %vm556, %v927, 0.0
      %940 = vrot.lane.b32.xlu0 %v890, 127
      %v941 = vpop.permute.xlu0 %940
      %942 = vrot.lane.b32.xlu0 %v894, 127
      %v943 = vpop.permute.xlu0 %942
      %944 = vrot.lane.b32.xlu0 %v900, 127
      %v945 = vpop.permute.xlu0 %944
      %946 = vrot.lane.b32.xlu0 %v904, 127
      %v947 = vpop.permute.xlu0 %946
      %948 = vrot.lane.b32.xlu0 %v892, 127
      %v949 = vpop.permute.xlu0 %948
      %950 = vrot.lane.b32.xlu0 %v896, 127
      %v951 = vpop.permute.xlu0 %950
      %952 = vrot.lane.b32.xlu0 %v902, 127
      %v953 = vpop.permute.xlu0 %952
      %954 = vrot.lane.b32.xlu0 %v906, 127
      %v955 = vpop.permute.xlu0 %954
      %v956 = vsel %vm581, %v941, %v949
      %v957 = vsel %vm581, %v943, %v951
      %v958 = vsel %vm581, %v945, %v953
      %v959 = vsel %vm581, %v947, %v955
      %v960 = vsel %vm581, %v949, %v941
      %v961 = vsel %vm581, %v951, %v943
      %v962 = vsel %vm581, %v953, %v945
      %v963 = vsel %vm581, %v955, %v947
      %v964 = vsel %vm592, %v956, 0.0
      %v965 = vsel %vm593, %v960, 0.0
      %v966 = vsel %vm592, %v957, 0.0
      %v967 = vsel %vm593, %v961, 0.0
      %v968 = vsel %vm592, %v958, 0.0
      %v969 = vsel %vm593, %v962, 0.0
      %v970 = vsel %vm592, %v959, 0.0
      %v971 = vsel %vm593, %v963, 0.0
      %v976 = vunpack.c.l.b16 %v830
      %v977 = vunpack.c.l.b16 %v831
      %v978 = vunpack.c.l.b16 %v832
      %v979 = vunpack.c.l.b16 %v833
      %v980 = vpack.c.b16 %v977, %v976
      %v981 = vpack.c.b16 %v979, %v978
      %v983 = vsel %vm769, %v980, 0
      %v986 = vsel %vm769, %v981, 0
      %988 = vmatprep.subr.bf16.mxu0 0
      %989 = vmatpush1.bf16.msra.mxu0 0
      %990 = vmatprep.subr.bf16.mxu0 0
      %991 = vmatpush1.bf16.msra.mxu0 0
      %992 = vmatprep.subr.bf16.mxu0 0
      %993 = vmatpush1.bf16.msra.mxu0 0
      %994 = vmatprep.subr.bf16.mxu0 0
      %995 = vmatpush1.bf16.msra.mxu0 0
      %996 = vmatprep.subr.bf16.mxu0 0
      %997 = vmatpush1.bf16.msra.mxu0 0
      %998 = vmatprep.subr.bf16.mxu0 0
      %999 = vmatpush1.bf16.msra.mxu0 0
      %1000 = vmatprep.subr.bf16.mxu0 %v754
      %1001 = vmatpush1.bf16.msra.mxu0 %v753
      %1002 = vmatprep.subr.bf16.mxu0 %v752
      %1003 = vmatpush1.bf16.msra.mxu0 %v751
      %1004 = vmatprep.subr.bf16.mxu0 0
      %1005 = vmatpush2.bf16.msra.mxu0 0
      %1006 = vmatprep.subr.bf16.mxu0 0
      %1007 = vmatpush2.bf16.msra.mxu0 0
      %1008 = vmatprep.subr.bf16.mxu0 0
      %1009 = vmatpush2.bf16.msra.mxu0 0
      %1010 = vmatprep.subr.bf16.mxu0 0
      %1011 = vmatpush2.bf16.msra.mxu0 0
      %1012 = vmatprep.subr.bf16.mxu0 0
      %1013 = vmatpush2.bf16.msra.mxu0 0
      %1014 = vmatprep.subr.bf16.mxu0 0
      %1015 = vmatpush2.bf16.msra.mxu0 0
      %1016 = vmatprep.subr.bf16.mxu0 0
      %1017 = vmatpush2.bf16.msra.mxu0 0
      %1018 = vmatprep.subr.bf16.mxu0 0
      %1019 = vmatpush2.bf16.msra.mxu0 0
      %1020 = vmatprep.mubr.bf16.mxu0 0
      %1021 = vmatmul.mubr.bf16.gmra.mxu0 %v983
      %v1022 = vpop.f32.mrf.mxu0
      %v1023 = vadd.f32 %v932, %v1022
      %v1024 = vpop.f32.mrf.mxu0
      %v1025 = vadd.f32 %v933, %v1024
      %v1026 = vpop.f32.mrf.mxu0
      %v1027 = vadd.f32 %v934, %v1026
      %v1028 = vpop.f32.mrf.mxu0
      %v1029 = vadd.f32 %v935, %v1028
      %1030 = vmatprep.mubr.bf16.mxu0 0
      %1031 = vmatmul.mubr.bf16.gmra.mxu0 %v986
      %v1032 = vpop.f32.mrf.mxu0
      %v1033 = vadd.f32 %v936, %v1032
      %v1034 = vpop.f32.mrf.mxu0
      %v1035 = vadd.f32 %v937, %v1034
      %v1036 = vpop.f32.mrf.mxu0
      %v1037 = vadd.f32 %v938, %v1036
      %v1038 = vpop.f32.mrf.mxu0
      %v1039 = vadd.f32 %v939, %v1038
      %1040 = vdwg.mxu0
      %v1041 = vadd.f32 %v1023, %v964
      %v1042 = vadd.f32 %v1025, %v965
      %v1043 = vadd.f32 %v1027, %v966
      %v1044 = vadd.f32 %v1029, %v967
      %v1045 = vadd.f32 %v1033, %v968
      %v1046 = vadd.f32 %v1035, %v969
      %v1047 = vadd.f32 %v1037, %v970
      %v1048 = vadd.f32 %v1039, %v971
      %v1049 = vld [vmem:[%s4] sm:$0xff]
      %v1050 = vld [vmem:[%s4 + $0x8] sm:$0xff]
      %v1051 = vld [vmem:[%s4 + $0x10] sm:$0xff]
      %v1052 = vld [vmem:[%s4 + $0x18] sm:$0xff]
      %1054 = vset.pattern.permute.xlu0 0
      %1055 = vperm.xlu0 %1054, %v1049
      %v1056 = vpop.permute.xlu0 %1055
      %1059 = vset.pattern.permute.xlu0 0
      %1060 = vperm.xlu0 %1059, %v1050
      %v1061 = vpop.permute.xlu0 %1060
      %1064 = vset.pattern.permute.xlu0 0
      %1065 = vperm.xlu0 %1064, %v1051
      %v1066 = vpop.permute.xlu0 %1065
      %1069 = vset.pattern.permute.xlu0 0
      %1070 = vperm.xlu0 %1069, %v1052
      %v1071 = vpop.permute.xlu0 %1070
      %v1073 = vadd.f32 %v1041, %v1056
      %v1074 = vadd.f32 %v1042, %v1056
      %v1075 = vadd.f32 %v1043, %v1061
      %v1076 = vadd.f32 %v1044, %v1061
      %v1077 = vadd.f32 %v1045, %v1066
      %v1078 = vadd.f32 %v1046, %v1066
      %v1079 = vadd.f32 %v1047, %v1071
      %v1080 = vadd.f32 %v1048, %v1071
      %v1081 = vmax.f32 %v1073, 0.0
      %v1082 = vmax.f32 %v1074, 0.0
      %v1083 = vmax.f32 %v1075, 0.0
      %v1084 = vmax.f32 %v1076, 0.0
      %v1085 = vmax.f32 %v1077, 0.0
      %v1086 = vmax.f32 %v1078, 0.0
      %v1087 = vmax.f32 %v1079, 0.0
      %v1088 = vmax.f32 %v1080, 0.0
      %1089 = vst [vmem:[%s262] sm:$0xff] %v1081
      %1090 = vst [vmem:[%s262 + $0x8] sm:$0xff] %v1082
      %1091 = vst [vmem:[%s262 + $0x10] sm:$0xff] %v1083
      %1092 = vst [vmem:[%s262 + $0x18] sm:$0xff] %v1084
      %1093 = vst [vmem:[%s262 + $0x20] sm:$0xff] %v1085
      %1094 = vst [vmem:[%s262 + $0x28] sm:$0xff] %v1086
      %1095 = vst [vmem:[%s262 + $0x30] sm:$0xff] %v1087
      %1096 = vst [vmem:[%s262 + $0x38] sm:$0xff] %v1088
      %s1097 = smul.u32 2, %s21
      %p1098 = scmp.lt.s32.totalorder %s20, 1
      %s1099 = scalar_select %p1098, %s20, 1
      %p1100 = scmp.lt.s32.totalorder %s1097, 1
      %s1101 = scalar_select %p1100, %s1097, 1
      %s1102 = smul.addr %s1099, 8
      %s1103 = sadd.s32 %s1101, %s1102
      %s1104 = smul.addr %s1103, 8
      %s1105 = scalar_lea.vmem %s5, %s1104
      // Predicated region
      $region41: #{cnn_forward.1} parent=39 // pred_check
        %p1106 = pneg %p160
      $region42: #{cnn_forward.1} parent=39 // pred_check_branch
        %1108 = sbr.rel (%p1106) target = $region44
      $region43: #{cnn_forward.1} parent=39 // pred_region
        %s1109 = smul.u32 2, %s21
      $region44: #{cnn_forward.1} parent=39 // pred_fallthru
        _
    $region40: #{cnn_forward.1} parent=5 // pred_fallthru
      _
    %p1110 = scmp.le.s32.totalorder 2, %s11
    // Predicated region
    $region45: #{cnn_forward.1} parent=5 // pred_check
      %p1111 = pneg %p1110
    $region46: #{cnn_forward.1} parent=5 // pred_check_branch
      %1113 = sbr.rel (%p1111) target = $region48
    $region47: #{cnn_forward.1} parent=5 // pred_region
      %s1114 = ssub.s32 %s11, 2
      // Predicated region
      $region49: #{cnn_forward.1} parent=47 // pred_check
        %p1115 = pneg %p166
      $region50: #{cnn_forward.1} parent=47 // pred_check_branch
        %1117 = sbr.rel (%p1115) target = $region52
      $region51: #{cnn_forward.1} parent=47 // pred_region
        %s1118 = smul.u32 2, %s23
        %p1119 = scmp.lt.s32.totalorder %s22, 1
        %s1120 = scalar_select %p1119, %s22, 1
        %p1121 = scmp.lt.s32.totalorder %s1118, 1
        %s1122 = scalar_select %p1121, %s1118, 1
        %s1123 = smul.addr %s1120, 8
        %s1124 = sadd.s32 %s1122, %s1123
        %s1125 = smul.addr %s1124, 8
        %s1126 = scalar_lea.vmem %s5, %s1125
      $region52: #{cnn_forward.1} parent=47 // pred_fallthru
        _
    $region48: #{cnn_forward.1} parent=5 // pred_fallthru
      _
  $region6: #{cnn_forward.1} parent=0 // loop_footer
    %s15 = sadd.s32 1, %s11
  $region7: #{cnn_forward.1} parent=0 // loop_footer_branch
    %10 = sbr.rel target = $region3
  $region8: #{cnn_forward.1} parent=0 // loop_exit
    _

</llo_original>
